<compile_context>
chip_gen: v5e
topology: v5e:2x2
jax: 0.10.0
libtpu: 0.0.40
codegen_flags: <defaults>
</compile_context>

<pallas_src>
import jax
import jax.numpy as jnp
from jax.experimental import pallas as pl
from jax.experimental.pallas import tpu as pltpu


_GELU_C0 = 0.7978845608
_GELU_C1 = 0.044715


def _gelu_f32(h):
    # Factored form: h + c1*h^3 == h*(1 + c1*h^2) saves a full-tile VPU multiply;
    # tanh lands in the EUP slot.
    return 0.5 * h * (1.0 + jnp.tanh(_GELU_C0 * h * (1.0 + _GELU_C1 * (h * h))))


def _ffn_kernel_resident(x_ref, w1_ref, b1_ref, w2_ref, b2_ref, o_ref):
    # Weights fully resident in VMEM; single pass over the hidden dim.
    h = jnp.dot(x_ref[...], w1_ref[...], preferred_element_type=jnp.float32)
    g = _gelu_f32(h + b1_ref[...].astype(jnp.float32))
    acc = jnp.dot(g.astype(w2_ref.dtype), w2_ref[...],
                  preferred_element_type=jnp.float32)
    o_ref[...] = (acc + b2_ref[...].astype(jnp.float32)).astype(o_ref.dtype)


def _ffn_kernel_tiled(x_ref, w1_ref, b1_ref, w2_ref, b2_ref, o_ref, acc_ref):
    # Hidden dim tiled on grid axis 1; f32 VMEM accumulator for the 2nd matmul.
    k = pl.program_id(1)

    @pl.when(k == 0)
    def _():
        acc_ref[...] = jnp.zeros_like(acc_ref)

    h = jnp.dot(x_ref[...], w1_ref[...], preferred_element_type=jnp.float32)
    g = _gelu_f32(h + b1_ref[...].astype(jnp.float32))
    acc_ref[...] += jnp.dot(g.astype(w2_ref.dtype), w2_ref[...],
                            preferred_element_type=jnp.float32)

    @pl.when(k == pl.num_programs(1) - 1)
    def _():
        o_ref[...] = (acc_ref[...] + b2_ref[...].astype(jnp.float32)).astype(o_ref.dtype)


def _round_up(x, m):
    return ((x + m - 1) // m) * m


def _vmem_capacity_bytes():
    """Per-core VMEM capacity (generation-aware), with a conservative fallback."""
    try:
        info = pltpu.get_tpu_info()
        cap = getattr(info, "vmem_capacity_bytes", None)
        if cap:
            return int(min(int(cap), 128 << 20))
    except Exception:
        pass
    return 64 << 20  # conservative (v7x per-TC)


def _vmem_cost(tm, th, d_in, op_bytes, out_bytes, n_k):
    """Estimate of VMEM bytes for a (tm, th) tiling, incl. double buffering."""
    cost = 2 * tm * d_in * op_bytes          # x row tiles
    cost += 2 * tm * d_in * out_bytes        # out row tiles
    cost += 2 * d_in * th * op_bytes         # W1 slices
    cost += 2 * th * d_in * op_bytes         # W2 slices
    cost += 2 * (th + d_in) * 4              # biases (f32)
    if n_k > 1:
        cost += tm * d_in * 4                # f32 accumulator scratch
    cost += 3 * tm * th * 4                  # in-body f32 intermediates (h, h^2, gelu)
    return cost


def _choose_tiles(d_in, d_hidden, op_bytes, out_bytes, vmem_budget):
    """Pick (tm, th): prefer resident weights with a big row tile, else the
    largest row tile / fewest hidden steps that fit the VMEM budget."""
    h128 = _round_up(d_hidden, 128)
    th_cands = [h128] + [c for c in (1024, 512, 256, 128) if c < h128]
    tm_cands = (1024, 768, 512, 384, 256, 128, 64, 32, 16)
    best = None
    for th in th_cands:
        n_k = _round_up(d_hidden, th) // th
        for tm in tm_cands:
            if _vmem_cost(tm, th, d_in, op_bytes, out_bytes, n_k) > vmem_budget:
                continue
            # Resident weights only count as a win with a reasonable row tile.
            key = (int(n_k == 1 and tm >= 256), tm, -n_k)
            if best is None or key > best[0]:
                best = (key, tm, th)
    if best is None:
        return 16, 128
    return best[1], best[2]


def transformer_feed_forward(x, w1, b1, w2, b2, *, tm=None, th=None,
                             cast_to_bf16=True):
    """BERT-style FFN.

    x:  (..., input_dim)
    w1: (input_dim, hidden_dim)   (PyTorch Linear weight, already transposed)
    b1: (hidden_dim,)
    w2: (hidden_dim, input_dim)
    b2: (input_dim,)
    """
    orig_shape = x.shape
    orig_dtype = x.dtype
    d_in = orig_shape[-1]
    d_hidden = w1.shape[1]

    # bf16 MXU operands by default; accumulation / bias / GELU stay f32.
    if cast_to_bf16 and x.dtype == jnp.float32:
        x_op = x.astype(jnp.bfloat16)
        w1_op = w1.astype(jnp.bfloat16)
        w2_op = w2.astype(jnp.bfloat16)
    else:
        x_op, w1_op, w2_op = x, w1, w2

    x2d = x_op.reshape(-1, d_in)
    m = x2d.shape[0]
    op_bytes = jnp.dtype(x2d.dtype).itemsize
    out_bytes = jnp.dtype(orig_dtype).itemsize

    vmem_cap = _vmem_capacity_bytes()
    vmem_budget = (vmem_cap * 3) // 4          # headroom for compiler internals

    tm_sel, th_sel = _choose_tiles(d_in, d_hidden, op_bytes, out_bytes, vmem_budget)
    if tm is not None:
        tm_sel = _round_up(int(tm), 16)
    if th is not None:
        th_sel = _round_up(int(th), 128)

    # Row tile / padding: multiple of 16 covers bf16 (16,128) packing (and f32).
    tm_sel = max(16, min(tm_sel, _round_up(m, 16)))
    m_pad = _round_up(m, tm_sel)
    if m_pad != m:
        x2d = jnp.pad(x2d, ((0, m_pad - m), (0, 0)))

    # Hidden padding up to a multiple of the hidden tile (zeros -> GELU(0)==0, exact).
    h_pad = _round_up(d_hidden, th_sel)
    if h_pad != d_hidden:
        pad_h = h_pad - d_hidden
        w1_op = jnp.pad(w1_op, ((0, 0), (0, pad_h)))
        w2_op = jnp.pad(w2_op, ((0, pad_h), (0, 0)))
        b1 = jnp.pad(b1, ((0, pad_h),))
    n_k = h_pad // th_sel

    b1_2d = b1.reshape(1, h_pad).astype(jnp.float32)
    b2_2d = b2.reshape(1, d_in).astype(jnp.float32)

    vmem_est = _vmem_cost(tm_sel, th_sel, d_in, op_bytes, out_bytes, n_k)
    vmem_limit = int(min(vmem_cap - (2 << 20), max(vmem_est + (8 << 20), 32 << 20)))

    cost = pl.CostEstimate(
        flops=int(4 * m_pad * d_in * h_pad),
        transcendentals=int(m_pad * h_pad),
        bytes_accessed=int(m_pad * d_in * (op_bytes + out_bytes)
                           + d_in * h_pad * op_bytes * 2
                           + (h_pad + d_in) * 4),
    )

    if n_k == 1:
        # Weight-resident path: constant index maps for W1/W2/b1/b2 -> no
        # re-DMA of the weights across row tiles.
        kernel = _ffn_kernel_resident
        grid = (m_pad // tm_sel,)
        in_specs = [
            pl.BlockSpec((tm_sel, d_in), lambda i: (i, 0)),   # x row tile
            pl.BlockSpec((d_in, h_pad), lambda i: (0, 0)),    # W1 (resident)
            pl.BlockSpec((1, h_pad), lambda i: (0, 0)),       # b1
            pl.BlockSpec((h_pad, d_in), lambda i: (0, 0)),    # W2 (resident)
            pl.BlockSpec((1, d_in), lambda i: (0, 0)),        # b2
        ]
        out_specs = pl.BlockSpec((tm_sel, d_in), lambda i: (i, 0))
        scratch = []
        dims = ("parallel",)
    else:
        kernel = _ffn_kernel_tiled
        grid = (m_pad // tm_sel, n_k)
        in_specs = [
            pl.BlockSpec((tm_sel, d_in), lambda i, k: (i, 0)),  # x row tile
            pl.BlockSpec((d_in, th_sel), lambda i, k: (0, k)),  # W1 hidden slice
            pl.BlockSpec((1, th_sel), lambda i, k: (0, k)),     # b1 hidden slice
            pl.BlockSpec((th_sel, d_in), lambda i, k: (k, 0)),  # W2 hidden slice
            pl.BlockSpec((1, d_in), lambda i, k: (0, 0)),       # b2 (full)
        ]
        out_specs = pl.BlockSpec((tm_sel, d_in), lambda i, k: (i, 0))
        scratch = [pltpu.VMEM((tm_sel, d_in), jnp.float32)]
        dims = ("parallel", "arbitrary")

    out = pl.pallas_call(
        kernel,
        out_shape=jax.ShapeDtypeStruct((m_pad, d_in), orig_dtype),
        grid_spec=pltpu.PrefetchScalarGridSpec(
            num_scalar_prefetch=0,
            grid=grid,
            in_specs=in_specs,
            out_specs=out_specs,
            scratch_shapes=scratch,
        ),
        compiler_params=pltpu.CompilerParams(
            dimension_semantics=dims,
            vmem_limit_bytes=vmem_limit,
        ),
        cost_estimate=cost,
    )(x2d, w1_op, b1_2d, w2_op, b2_2d)

    if m_pad != m:
        out = out[:m]
    return out.reshape(orig_shape)


def _reference(x, w1, b1, w2, b2, *, cast_to_bf16):
    """Pure-JAX reference with the same operand dtypes as the kernel."""
    if cast_to_bf16:
        xo, w1o, w2o = (a.astype(jnp.bfloat16) for a in (x, w1, w2))
    else:
        xo, w1o, w2o = x, w1, w2
    h = jnp.dot(xo, w1o, preferred_element_type=jnp.float32) + b1.astype(jnp.float32)
    g = 0.5 * h * (1.0 + jnp.tanh(0.7978845608 * (h + 0.044715 * h ** 3)))
    if cast_to_bf16:
        g = g.astype(jnp.bfloat16)
    out = jnp.dot(g, w2o, preferred_element_type=jnp.float32) + b2.astype(jnp.float32)
    return out.astype(x.dtype)


if __name__ == "__main__":
    key = jax.random.PRNGKey(0)
    batch, seq, input_dim, hidden_dim = 2, 8, 128, 256

    k_x, k_w1, k_b1, k_w2, k_b2 = jax.random.split(key, 5)
    x = jax.random.normal(k_x, (batch, seq, input_dim), dtype=jnp.float32)
    # Parameters kept as (in, out) — i.e. PyTorch Linear weights pre-transposed.
    w1 = jax.random.normal(k_w1, (input_dim, hidden_dim), dtype=jnp.float32) * 0.02
    b1 = jax.random.normal(k_b1, (hidden_dim,), dtype=jnp.float32) * 0.02
    w2 = jax.random.normal(k_w2, (hidden_dim, input_dim), dtype=jnp.float32) * 0.02
    b2 = jax.random.normal(k_b2, (input_dim,), dtype=jnp.float32) * 0.02

    # 1) f32 operand path, weight-resident (single hidden step) — tight check.
    out_f32 = jax.block_until_ready(
        transformer_feed_forward(x, w1, b1, w2, b2, cast_to_bf16=False))
    ref_f32 = _reference(x, w1, b1, w2, b2, cast_to_bf16=False)
    assert out_f32.shape == x.shape
    assert jnp.allclose(out_f32, ref_f32, atol=1e-4, rtol=1e-4), "f32 path mismatch"

    # 2) Default bf16 fast path with a ragged hidden dim (200 -> padded to 256)
    #    and a forced 128-wide hidden tile to exercise the k-accumulator path.
    hid2 = 200
    w1b, b1b, w2b = w1[:, :hid2], b1[:hid2], w2[:hid2, :]
    out_bf = jax.block_until_ready(
        transformer_feed_forward(x, w1b, b1b, w2b, b2, th=128))
    ref_bf = _reference(x, w1b, b1b, w2b, b2, cast_to_bf16=True)
    assert out_bf.shape == x.shape
    assert jnp.allclose(out_bf, ref_bf, atol=2e-3, rtol=2e-2), "bf16 path mismatch"

    print("KERNEL_OK")
</pallas_src>

<mosaic_0001>
module attributes {stable_mosaic.version = 11 : i64} {
  func.func @_ffn_kernel_resident(%arg0: i32, %arg1: memref<16x128xf32, #tpu.memory_space<vmem>>, %arg2: memref<128x256xf32, #tpu.memory_space<vmem>>, %arg3: memref<1x256xf32, #tpu.memory_space<vmem>>, %arg4: memref<256x128xf32, #tpu.memory_space<vmem>>, %arg5: memref<1x128xf32, #tpu.memory_space<vmem>>, %arg6: memref<16x128xf32, #tpu.memory_space<vmem>>) attributes {dimension_semantics = [#tpu.dimension_semantics<parallel>], iteration_bounds = array<i64: 1>, scalar_prefetch = 0 : i64, scratch_operands = 0 : i64, tpu.core_type = #tpu.core_type<tc>, window_params = [{transform_indices = @transform_0, window_bounds = array<i64: 16, 128>}, {pipeline_mode = #tpu.pipeline_mode<synchronous>, transform_indices = @transform_1, window_bounds = array<i64: 128, 256>}, {pipeline_mode = #tpu.pipeline_mode<synchronous>, transform_indices = @transform_2, window_bounds = array<i64: 1, 256>}, {pipeline_mode = #tpu.pipeline_mode<synchronous>, transform_indices = @transform_3, window_bounds = array<i64: 256, 128>}, {pipeline_mode = #tpu.pipeline_mode<synchronous>, transform_indices = @transform_4, window_bounds = array<i64: 1, 128>}, {transform_indices = @transform_5, window_bounds = array<i64: 16, 128>}]} {
    %c0 = arith.constant 0 : index
    %c0_0 = arith.constant 0 : index
    %0 = vector.load %arg1[%c0, %c0_0] : memref<16x128xf32, #tpu.memory_space<vmem>>, vector<16x128xf32>
    %c0_1 = arith.constant 0 : index
    %c0_2 = arith.constant 0 : index
    %1 = vector.load %arg2[%c0_1, %c0_2] : memref<128x256xf32, #tpu.memory_space<vmem>>, vector<128x256xf32>
    %cst = arith.constant dense<0.000000e+00> : vector<16x256xf32>
    %2 = tpu.matmul %0, %1, %cst {dimension_numbers = #tpu.dot_dimension_numbers<[1], [0], [0], [1], [0, 0, 1, 1], [], []>} : vector<16x128xf32>, vector<128x256xf32>, vector<16x256xf32> -> vector<16x256xf32>
    %c0_3 = arith.constant 0 : index
    %c0_4 = arith.constant 0 : index
    %3 = vector.load %arg3[%c0_3, %c0_4] : memref<1x256xf32, #tpu.memory_space<vmem>>, vector<1x256xf32>
    %4 = vector.broadcast %3 : vector<1x256xf32> to vector<16x256xf32>
    %5 = arith.addf %2, %4 : vector<16x256xf32>
    %cst_5 = arith.constant 5.000000e-01 : f32
    %6 = vector.broadcast %cst_5 : f32 to vector<16x256xf32>
    %7 = arith.mulf %6, %5 : vector<16x256xf32>
    %cst_6 = arith.constant 0.797884583 : f32
    %8 = vector.broadcast %cst_6 : f32 to vector<16x256xf32>
    %9 = arith.mulf %8, %5 : vector<16x256xf32>
    %10 = arith.mulf %5, %5 : vector<16x256xf32>
    %cst_7 = arith.constant 4.471500e-02 : f32
    %11 = vector.broadcast %cst_7 : f32 to vector<16x256xf32>
    %12 = arith.mulf %11, %10 : vector<16x256xf32>
    %cst_8 = arith.constant 1.000000e+00 : f32
    %13 = vector.broadcast %cst_8 : f32 to vector<16x256xf32>
    %14 = arith.addf %13, %12 : vector<16x256xf32>
    %15 = arith.mulf %9, %14 : vector<16x256xf32>
    %16 = math.tanh %15 : vector<16x256xf32>
    %cst_9 = arith.constant 1.000000e+00 : f32
    %17 = vector.broadcast %cst_9 : f32 to vector<16x256xf32>
    %18 = arith.addf %17, %16 : vector<16x256xf32>
    %19 = arith.mulf %7, %18 : vector<16x256xf32>
    %c0_10 = arith.constant 0 : index
    %c0_11 = arith.constant 0 : index
    %20 = vector.load %arg4[%c0_10, %c0_11] : memref<256x128xf32, #tpu.memory_space<vmem>>, vector<256x128xf32>
    %cst_12 = arith.constant dense<0.000000e+00> : vector<16x128xf32>
    %21 = tpu.matmul %19, %20, %cst_12 {dimension_numbers = #tpu.dot_dimension_numbers<[1], [0], [0], [1], [0, 0, 1, 1], [], []>} : vector<16x256xf32>, vector<256x128xf32>, vector<16x128xf32> -> vector<16x128xf32>
    %c0_13 = arith.constant 0 : index
    %c0_14 = arith.constant 0 : index
    %22 = vector.load %arg5[%c0_13, %c0_14] : memref<1x128xf32, #tpu.memory_space<vmem>>, vector<1x128xf32>
    %23 = vector.broadcast %22 : vector<1x128xf32> to vector<16x128xf32>
    %24 = arith.addf %21, %23 : vector<16x128xf32>
    %c0_15 = arith.constant 0 : index
    %c0_16 = arith.constant 0 : index
    %25 = vector.load %arg6[%c0_15, %c0_16] : memref<16x128xf32, #tpu.memory_space<vmem>>, vector<16x128xf32>
    tpu.vector_store %arg6[%c0_15, %c0_16], %24 {strides = array<i32>} : memref<16x128xf32, #tpu.memory_space<vmem>>, vector<16x128xf32>,
    return
  }
  func.func @transform_0(%arg0: i32) -> (i32, i32) {
    %c0_i32 = arith.constant 0 : i32
    %c0_i32_0 = arith.constant 0 : i32
    return %arg0, %c0_i32 : i32, i32
  }
  func.func @transform_1(%arg0: i32) -> (i32, i32) {
    %c0_i32 = arith.constant 0 : i32
    %c0_i32_0 = arith.constant 0 : i32
    %c0_i32_1 = arith.constant 0 : i32
    return %c0_i32, %c0_i32_0 : i32, i32
  }
  func.func @transform_2(%arg0: i32) -> (i32, i32) {
    %c0_i32 = arith.constant 0 : i32
    %c0_i32_0 = arith.constant 0 : i32
    %c0_i32_1 = arith.constant 0 : i32
    return %c0_i32, %c0_i32_0 : i32, i32
  }
  func.func @transform_3(%arg0: i32) -> (i32, i32) {
    %c0_i32 = arith.constant 0 : i32
    %c0_i32_0 = arith.constant 0 : i32
    %c0_i32_1 = arith.constant 0 : i32
    return %c0_i32, %c0_i32_0 : i32, i32
  }
  func.func @transform_4(%arg0: i32) -> (i32, i32) {
    %c0_i32 = arith.constant 0 : i32
    %c0_i32_0 = arith.constant 0 : i32
    %c0_i32_1 = arith.constant 0 : i32
    return %c0_i32, %c0_i32_0 : i32, i32
  }
  func.func @transform_5(%arg0: i32) -> (i32, i32) {
    %c0_i32 = arith.constant 0 : i32
    %c0_i32_0 = arith.constant 0 : i32
    return %arg0, %c0_i32 : i32, i32
  }
}

</mosaic_0001>

<llo_original>
// kernel: tpu_custom_call.1
$region0: #{tpu_custom_call.1}
  #allocation0 [shape = 'u32[]', space=smem, size = 0x4, offset = 0x4, fixed_abs, tag = 'smem constant byte address 0x4 - core index']
  #allocation1 [shape = 'u32[72,128]{1,0:T(1,128)}', space=vmem, size = 0x9000, scoped, tag = 'internal scratch']
  %s0 = inlined_call_operand.hbm [shape: f32[16,128], index: 0, kind: input, shape index: {}]
  %s1 = inlined_call_operand.hbm [shape: f32[128,256], index: 1, kind: input, shape index: {}]
  %s2 = inlined_call_operand.hbm [shape: f32[1,256], index: 2, kind: input, shape index: {}]
  %s3 = inlined_call_operand.hbm [shape: f32[256,128], index: 3, kind: input, shape index: {}]
  %s4 = inlined_call_operand.vmem [shape: f32[1,128], index: 4, kind: input, shape index: {}]
  %s5 = inlined_call_operand.hbm [shape: f32[16,128], index: 5, kind: output, shape index: {}]
  %s6 = sld [smem:[#allocation0]]
  $region46: #{tpu_custom_call.1} parent=0
    _
  %s8 = ssub.s32 1, %s6
  %s9 = scalar_select 0, %s8, %s6
  $region1: #{tpu_custom_call.1} parent=0
    #allocation2 [shape = 'u8[8192]{0}', space=vmem, size = 0x2000, scoped, tag = 'input window, operand 0, single buffered']
    #allocation3 [shape = 's32[1]{0}', space=sflag, size = 0x4, scoped, tag = 'scoped memory for tpu_custom_call.1']
    #allocation4 [shape = 's32[1]{0}', space=sflag, size = 0x4, scoped, tag = 'scoped memory for tpu_custom_call.1']
    #allocation5 [shape = 'u8[131072]{0}', space=vmem, size = 0x20000, scoped, tag = 'input window, operand 1, single buffered']
    #allocation6 [shape = 's32[1]{0}', space=sflag, size = 0x4, scoped, tag = 'scoped memory for tpu_custom_call.1']
    #allocation7 [shape = 'u8[1024]{0}', space=vmem, size = 0x400, scoped, tag = 'input window, operand 2, single buffered']
    #allocation8 [shape = 'u8[131072]{0}', space=vmem, size = 0x20000, scoped, tag = 'input window, operand 3, single buffered']
    #allocation9 [shape = 's32[1]{0}', space=sflag, size = 0x4, scoped, tag = 'scoped memory for tpu_custom_call.1']
    #allocation10 [shape = 'u8[8192]{0}', space=vmem, size = 0x2000, scoped, tag = 'output window, operand 0, single buffered']
    %10 = vsyncpa [#allocation3], 0
    %11 = vsyncpa [#allocation6], 0
    %12 = vsyncpa [#allocation9], 0
    %13 = vsyncpa [#allocation4], 0
    // Predicated region
    $region2: #{tpu_custom_call.1} parent=1 // pred_check
      _
    $region3: #{tpu_custom_call.1} parent=1 // pred_check_branch
      %15 = sbr.rel (0) target = $region5
    $region4: #{tpu_custom_call.1} parent=1 // pred_region
      %17 = vsyncadd [#allocation3], 0
      %s18 = sshll.u32 %s0, 4
      %s19 = int_to_ptr.hbm [resolvable:$true] %s18
      %s20 = sshll.u32 [#allocation2], 4
      %s21 = int_to_ptr.vmem [resolvable:$true] %s20
      %26 = dma.hbm_to_vmem [thread:$0]  %s19, 256, %s21, [#allocation3], 128, 128, 8
    $region5: #{tpu_custom_call.1} parent=1 // pred_fallthru
      _
    // Predicated region
    $region6: #{tpu_custom_call.1} parent=1 // pred_check
      _
    $region7: #{tpu_custom_call.1} parent=1 // pred_check_branch
      %28 = sbr.rel (0) target = $region9
    $region8: #{tpu_custom_call.1} parent=1 // pred_region
      %30 = vsyncadd [#allocation6], 0
      %s31 = sshll.u32 %s1, 4
      %s32 = int_to_ptr.hbm [resolvable:$true] %s31
      %s33 = sshll.u32 [#allocation5], 4
      %s34 = int_to_ptr.vmem [resolvable:$true] %s33
      %39 = dma.hbm_to_vmem [thread:$0]  %s32, 4096, %s34, [#allocation6], 256, 256, 16
    $region9: #{tpu_custom_call.1} parent=1 // pred_fallthru
      _
    // Predicated region
    $region10: #{tpu_custom_call.1} parent=1 // pred_check
      _
    $region11: #{tpu_custom_call.1} parent=1 // pred_check_branch
      %41 = sbr.rel (0) target = $region13
    $region12: #{tpu_custom_call.1} parent=1 // pred_region
      %43 = vsyncadd [#allocation6], 0
      %s45 = sshll.u32 %s2, 4
      %s46 = int_to_ptr.hbm [resolvable:$true] %s45
      %s47 = sshll.u32 [#allocation7], 4
      %s48 = int_to_ptr.vmem [resolvable:$true] %s47
      %50 = dma.hbm_to_vmem [thread:$0]  %s46, 32, %s48, [#allocation6]
    $region13: #{tpu_custom_call.1} parent=1 // pred_fallthru
      _
    // Predicated region
    $region14: #{tpu_custom_call.1} parent=1 // pred_check
      _
    $region15: #{tpu_custom_call.1} parent=1 // pred_check_branch
      %52 = sbr.rel (0) target = $region17
    $region16: #{tpu_custom_call.1} parent=1 // pred_region
      %54 = vsyncadd [#allocation9], 0
      %s55 = sshll.u32 %s3, 4
      %s56 = int_to_ptr.hbm [resolvable:$true] %s55
      %s57 = sshll.u32 [#allocation8], 4
      %s58 = int_to_ptr.vmem [resolvable:$true] %s57
      %63 = dma.hbm_to_vmem [thread:$0]  %s56, 4096, %s58, [#allocation9], 128, 128, 8
    $region17: #{tpu_custom_call.1} parent=1 // pred_fallthru
      _
    // Predicated region
    $region18: #{tpu_custom_call.1} parent=1 // pred_check
      _
    $region19: #{tpu_custom_call.1} parent=1 // pred_check_branch
      %65 = sbr.rel (0) target = $region21
    $region20: #{tpu_custom_call.1} parent=1 // pred_region
      _
    $region21: #{tpu_custom_call.1} parent=1 // pred_fallthru
      _
    // Predicated region
    $region22: #{tpu_custom_call.1} parent=1 // pred_check
      _
    $region23: #{tpu_custom_call.1} parent=1 // pred_check_branch
      %67 = sbr.rel (0) target = $region25
    $region24: #{tpu_custom_call.1} parent=1 // pred_region
      %69 = dma.done [#allocation3], 256
    $region25: #{tpu_custom_call.1} parent=1 // pred_fallthru
      _
    // Predicated region
    $region26: #{tpu_custom_call.1} parent=1 // pred_check
      _
    $region27: #{tpu_custom_call.1} parent=1 // pred_check_branch
      %71 = sbr.rel (0) target = $region29
    $region28: #{tpu_custom_call.1} parent=1 // pred_region
      %73 = dma.done [#allocation6], 4096
    $region29: #{tpu_custom_call.1} parent=1 // pred_fallthru
      _
    // Predicated region
    $region30: #{tpu_custom_call.1} parent=1 // pred_check
      _
    $region31: #{tpu_custom_call.1} parent=1 // pred_check_branch
      %75 = sbr.rel (0) target = $region33
    $region32: #{tpu_custom_call.1} parent=1 // pred_region
      %77 = dma.done [#allocation6], 32
    $region33: #{tpu_custom_call.1} parent=1 // pred_fallthru
      _
    // Predicated region
    $region34: #{tpu_custom_call.1} parent=1 // pred_check
      _
    $region35: #{tpu_custom_call.1} parent=1 // pred_check_branch
      %79 = sbr.rel (0) target = $region37
    $region36: #{tpu_custom_call.1} parent=1 // pred_region
      %81 = dma.done [#allocation9], 4096
    $region37: #{tpu_custom_call.1} parent=1 // pred_fallthru
      _
    %v82 = vld [vmem:[#allocation2] sm:$0xff]
    %v83 = vld [vmem:[#allocation2 + $0x8] sm:$0xff]
    %v84 = vld [vmem:[#allocation5] sm:$0xff]
    %v85 = vld [vmem:[#allocation5 + $0x8] sm:$0xff]
    %v86 = vld [vmem:[#allocation5 + $0x10] sm:$0xff]
    %v87 = vld [vmem:[#allocation5 + $0x18] sm:$0xff]
    %v88 = vld [vmem:[#allocation5 + $0x20] sm:$0xff]
    %v89 = vld [vmem:[#allocation5 + $0x28] sm:$0xff]
    %v90 = vld [vmem:[#allocation5 + $0x30] sm:$0xff]
    %v91 = vld [vmem:[#allocation5 + $0x38] sm:$0xff]
    %v92 = vld [vmem:[#allocation5 + $0x40] sm:$0xff]
    %v93 = vld [vmem:[#allocation5 + $0x48] sm:$0xff]
    %v94 = vld [vmem:[#allocation5 + $0x50] sm:$0xff]
    %v95 = vld [vmem:[#allocation5 + $0x58] sm:$0xff]
    %v96 = vld [vmem:[#allocation5 + $0x60] sm:$0xff]
    %v97 = vld [vmem:[#allocation5 + $0x68] sm:$0xff]
    %v98 = vld [vmem:[#allocation5 + $0x70] sm:$0xff]
    %v99 = vld [vmem:[#allocation5 + $0x78] sm:$0xff]
    %v100 = vld [vmem:[#allocation5 + $0x80] sm:$0xff]
    %v101 = vld [vmem:[#allocation5 + $0x88] sm:$0xff]
    %v102 = vld [vmem:[#allocation5 + $0x90] sm:$0xff]
    %v103 = vld [vmem:[#allocation5 + $0x98] sm:$0xff]
    %v104 = vld [vmem:[#allocation5 + $0xa0] sm:$0xff]
    %v105 = vld [vmem:[#allocation5 + $0xa8] sm:$0xff]
    %v106 = vld [vmem:[#allocation5 + $0xb0] sm:$0xff]
    %v107 = vld [vmem:[#allocation5 + $0xb8] sm:$0xff]
    %v108 = vld [vmem:[#allocation5 + $0xc0] sm:$0xff]
    %v109 = vld [vmem:[#allocation5 + $0xc8] sm:$0xff]
    %v110 = vld [vmem:[#allocation5 + $0xd0] sm:$0xff]
    %v111 = vld [vmem:[#allocation5 + $0xd8] sm:$0xff]
    %v112 = vld [vmem:[#allocation5 + $0xe0] sm:$0xff]
    %v113 = vld [vmem:[#allocation5 + $0xe8] sm:$0xff]
    %v114 = vld [vmem:[#allocation5 + $0xf0] sm:$0xff]
    %v115 = vld [vmem:[#allocation5 + $0xf8] sm:$0xff]
    %v116 = vld [vmem:[#allocation7] sm:$0x3]
    %v118 = vperm.slane %v116, 0
    %v119 = vperm.slane %v116, 1
    %122 = vmatpush.msra.mxu0 %v114
    %123 = vmatpush.msra.mxu0 %v112
    %124 = vmatpush.msra.mxu0 %v110
    %125 = vmatpush.msra.mxu0 %v108
    %126 = vmatpush.msra.mxu0 %v106
    %127 = vmatpush.msra.mxu0 %v104
    %128 = vmatpush.msra.mxu0 %v102
    %129 = vmatpush.msra.mxu0 %v100
    %130 = vmatpush.msra.mxu0 %v98
    %131 = vmatpush.msra.mxu0 %v96
    %132 = vmatpush.msra.mxu0 %v94
    %133 = vmatpush.msra.mxu0 %v92
    %134 = vmatpush.msra.mxu0 %v90
    %135 = vmatpush.msra.mxu0 %v88
    %136 = vmatpush.msra.mxu0 %v86
    %137 = vmatpush.msra.mxu0 %v84
    %138 = vmatmul.f32.gmra.mxu0 %v82
    %v139 = vpop.f32.mrf.mxu0
    %v140 = vadd.f32 %v118, %v139
    %141 = vmatmul.f32.gmra.mxu0 %v83
    %v142 = vpop.f32.mrf.mxu0
    %v143 = vadd.f32 %v118, %v142
    %144 = vdwg.mxu0
    %145 = vmatpush.msra.mxu0 %v115
    %146 = vmatpush.msra.mxu0 %v113
    %147 = vmatpush.msra.mxu0 %v111
    %148 = vmatpush.msra.mxu0 %v109
    %149 = vmatpush.msra.mxu0 %v107
    %150 = vmatpush.msra.mxu0 %v105
    %151 = vmatpush.msra.mxu0 %v103
    %152 = vmatpush.msra.mxu0 %v101
    %153 = vmatpush.msra.mxu0 %v99
    %154 = vmatpush.msra.mxu0 %v97
    %155 = vmatpush.msra.mxu0 %v95
    %156 = vmatpush.msra.mxu0 %v93
    %157 = vmatpush.msra.mxu0 %v91
    %158 = vmatpush.msra.mxu0 %v89
    %159 = vmatpush.msra.mxu0 %v87
    %160 = vmatpush.msra.mxu0 %v85
    %161 = vmatmul.f32.gmra.mxu0 %v82
    %v162 = vpop.f32.mrf.mxu0
    %v163 = vadd.f32 %v119, %v162
    %164 = vmatmul.f32.gmra.mxu0 %v83
    %v165 = vpop.f32.mrf.mxu0
    %v166 = vadd.f32 %v119, %v165
    %167 = vdwg.mxu0
    %v168 = vmul.f32 %v140, 0.5
    %v169 = vmul.f32 %v163, 0.5
    %v170 = vmul.f32 %v143, 0.5
    %v171 = vmul.f32 %v166, 0.5
    %v172 = vmul.f32 %v140, 0.7978846
    %v173 = vmul.f32 %v163, 0.7978846
    %v174 = vmul.f32 %v143, 0.7978846
    %v175 = vmul.f32 %v166, 0.7978846
    %v176 = vmul.f32 %v140, %v140
    %v177 = vmul.f32 %v163, %v163
    %v178 = vmul.f32 %v143, %v143
    %v179 = vmul.f32 %v166, %v166
    %v180 = vmul.f32 %v176, 0.044715
    %v181 = vmul.f32 %v177, 0.044715
    %v182 = vmul.f32 %v178, 0.044715
    %v183 = vmul.f32 %v179, 0.044715
    %v184 = vadd.f32 %v180, 1.0
    %v185 = vadd.f32 %v181, 1.0
    %v186 = vadd.f32 %v182, 1.0
    %v187 = vadd.f32 %v183, 1.0
    %v188 = vmul.f32 %v172, %v184
    %v189 = vmul.f32 %v173, %v185
    %v190 = vmul.f32 %v174, %v186
    %v191 = vmul.f32 %v175, %v187
    %v192 = vtanh.pop %v188
    %v193 = vtanh.pop %v189
    %v194 = vtanh.pop %v190
    %v195 = vtanh.pop %v191
    %v196 = vadd.f32 %v192, 1.0
    %v197 = vadd.f32 %v193, 1.0
    %v198 = vadd.f32 %v194, 1.0
    %v199 = vadd.f32 %v195, 1.0
    %v200 = vmul.f32 %v168, %v196
    %v201 = vmul.f32 %v169, %v197
    %v202 = vmul.f32 %v170, %v198
    %v203 = vmul.f32 %v171, %v199
    %v204 = vld [vmem:[#allocation8] sm:$0xff]
    %v205 = vld [vmem:[#allocation8 + $0x8] sm:$0xff]
    %v206 = vld [vmem:[#allocation8 + $0x10] sm:$0xff]
    %v207 = vld [vmem:[#allocation8 + $0x18] sm:$0xff]
    %v208 = vld [vmem:[#allocation8 + $0x20] sm:$0xff]
    %v209 = vld [vmem:[#allocation8 + $0x28] sm:$0xff]
    %v210 = vld [vmem:[#allocation8 + $0x30] sm:$0xff]
    %v211 = vld [vmem:[#allocation8 + $0x38] sm:$0xff]
    %v212 = vld [vmem:[#allocation8 + $0x40] sm:$0xff]
    %v213 = vld [vmem:[#allocation8 + $0x48] sm:$0xff]
    %v214 = vld [vmem:[#allocation8 + $0x50] sm:$0xff]
    %v215 = vld [vmem:[#allocation8 + $0x58] sm:$0xff]
    %v216 = vld [vmem:[#allocation8 + $0x60] sm:$0xff]
    %v217 = vld [vmem:[#allocation8 + $0x68] sm:$0xff]
    %v218 = vld [vmem:[#allocation8 + $0x70] sm:$0xff]
    %v219 = vld [vmem:[#allocation8 + $0x78] sm:$0xff]
    %v220 = vld [vmem:[#allocation8 + $0x80] sm:$0xff]
    %v221 = vld [vmem:[#allocation8 + $0x88] sm:$0xff]
    %v222 = vld [vmem:[#allocation8 + $0x90] sm:$0xff]
    %v223 = vld [vmem:[#allocation8 + $0x98] sm:$0xff]
    %v224 = vld [vmem:[#allocation8 + $0xa0] sm:$0xff]
    %v225 = vld [vmem:[#allocation8 + $0xa8] sm:$0xff]
    %v226 = vld [vmem:[#allocation8 + $0xb0] sm:$0xff]
    %v227 = vld [vmem:[#allocation8 + $0xb8] sm:$0xff]
    %v228 = vld [vmem:[#allocation8 + $0xc0] sm:$0xff]
    %v229 = vld [vmem:[#allocation8 + $0xc8] sm:$0xff]
    %v230 = vld [vmem:[#allocation8 + $0xd0] sm:$0xff]
    %v231 = vld [vmem:[#allocation8 + $0xd8] sm:$0xff]
    %v232 = vld [vmem:[#allocation8 + $0xe0] sm:$0xff]
    %v233 = vld [vmem:[#allocation8 + $0xe8] sm:$0xff]
    %v234 = vld [vmem:[#allocation8 + $0xf0] sm:$0xff]
    %v235 = vld [vmem:[#allocation8 + $0xf8] sm:$0xff]
    %v236 = vld [vmem:[%s4] sm:$0x1]
    %v238 = vperm.slane %v236, 0
    %240 = vmatpush.msra.mxu0 %v219
    %241 = vmatpush.msra.mxu0 %v218
    %242 = vmatpush.msra.mxu0 %v217
    %243 = vmatpush.msra.mxu0 %v216
    %244 = vmatpush.msra.mxu0 %v215
    %245 = vmatpush.msra.mxu0 %v214
    %246 = vmatpush.msra.mxu0 %v213
    %247 = vmatpush.msra.mxu0 %v212
    %248 = vmatpush.msra.mxu0 %v211
    %249 = vmatpush.msra.mxu0 %v210
    %250 = vmatpush.msra.mxu0 %v209
    %251 = vmatpush.msra.mxu0 %v208
    %252 = vmatpush.msra.mxu0 %v207
    %253 = vmatpush.msra.mxu0 %v206
    %254 = vmatpush.msra.mxu0 %v205
    %255 = vmatpush.msra.mxu0 %v204
    %256 = vmatmul.f32.gmra.mxu0 %v200
    %v257 = vpop.f32.mrf.mxu0
    %v258 = vadd.f32 %v238, %v257
    %259 = vmatmul.f32.gmra.mxu0 %v202
    %v260 = vpop.f32.mrf.mxu0
    %v261 = vadd.f32 %v238, %v260
    %262 = vdwg.mxu0
    %263 = vmatpush.msra.mxu0 %v235
    %264 = vmatpush.msra.mxu0 %v234
    %265 = vmatpush.msra.mxu0 %v233
    %266 = vmatpush.msra.mxu0 %v232
    %267 = vmatpush.msra.mxu0 %v231
    %268 = vmatpush.msra.mxu0 %v230
    %269 = vmatpush.msra.mxu0 %v229
    %270 = vmatpush.msra.mxu0 %v228
    %271 = vmatpush.msra.mxu0 %v227
    %272 = vmatpush.msra.mxu0 %v226
    %273 = vmatpush.msra.mxu0 %v225
    %274 = vmatpush.msra.mxu0 %v224
    %275 = vmatpush.msra.mxu0 %v223
    %276 = vmatpush.msra.mxu0 %v222
    %277 = vmatpush.msra.mxu0 %v221
    %278 = vmatpush.msra.mxu0 %v220
    %279 = vmatmul.f32.gmra.mxu0 %v201
    %v280 = vpop.f32.mrf.mxu0
    %v281 = vadd.f32 %v258, %v280
    %282 = vmatmul.f32.gmra.mxu0 %v203
    %v283 = vpop.f32.mrf.mxu0
    %v284 = vadd.f32 %v261, %v283
    %285 = vdwg.mxu0
    %286 = vst [vmem:[#allocation10] sm:$0xff] %v281
    %287 = vst [vmem:[#allocation10 + $0x8] sm:$0xff] %v284
    // Predicated region
    $region38: #{tpu_custom_call.1} parent=1 // pred_check
      _
    $region39: #{tpu_custom_call.1} parent=1 // pred_check_branch
      %289 = sbr.rel (0) target = $region41
    $region40: #{tpu_custom_call.1} parent=1 // pred_region
      %291 = vsyncadd [#allocation4], 0
      %s292 = sshll.u32 [#allocation10], 4
      %s293 = int_to_ptr.vmem [resolvable:$true] %s292
      %s294 = sshll.u32 %s5, 4
      %s295 = int_to_ptr.hbm [resolvable:$true] %s294
      %300 = dma.vmem_to_hbm [thread:$0]  %s293, 256, %s295, [#allocation4], 128, 128, 8
    $region41: #{tpu_custom_call.1} parent=1 // pred_fallthru
      _
    // Predicated region
    $region42: #{tpu_custom_call.1} parent=1 // pred_check
      _
    $region43: #{tpu_custom_call.1} parent=1 // pred_check_branch
      %302 = sbr.rel (0) target = $region45
    $region44: #{tpu_custom_call.1} parent=1 // pred_region
      %304 = dma.done [#allocation4], 256
    $region45: #{tpu_custom_call.1} parent=1 // pred_fallthru
      _
    %305 = vsyncpa [#allocation3], 1
    %306 = vsyncpa [#allocation6], 1
    %307 = vsyncpa [#allocation9], 1
    %308 = vsyncpa [#allocation4], 1

</llo_original>
